<compile_context>
chip_gen: v6e
topology: v6e:2x2x1
jax: 0.10.0
libtpu: 0.0.40
codegen_flags: <defaults>
</compile_context>

<pallas_src>
import functools

import jax
import jax.numpy as jnp
from jax.experimental import pallas as pl
from jax.experimental.pallas import tpu as pltpu

LN_EPS = 1e-6   # layernorm_epsilon
KQ_EPS = 1e-6   # key/query normalization epsilon


def _qkv_kernel(x_ref, wqk_ref, wv_ref, segf_ref, segb_ref,
                q_ref, k_ref, v_ref,
                *, embed_dim, compute_dtype, normalize_keys):
    e = embed_dim

    # ---- AGLayerNorm (RMS norm, f32 math; gain already folded into weights) ----
    x = x_ref[...].astype(jnp.float32)
    var = jnp.mean(x * x, axis=-1, keepdims=True)
    xn = (x * jax.lax.rsqrt(var + LN_EPS)).astype(compute_dtype)      # (tm, E)

    # ---- V projection: its own matmul, written straight to the output block ----
    v_ref[...] = jnp.dot(xn, wv_ref[...],
                         preferred_element_type=jnp.float32).astype(v_ref.dtype)

    # ---- Fused [Q | K] projection: one (tm,E)x(E,2E) MXU matmul, f32 acc -------
    qk = jnp.dot(xn, wqk_ref[...], preferred_element_type=jnp.float32)  # (tm, 2E)

    if normalize_keys:
        # Per-head L2 normalization, lane-layout preserving:
        #   segmented per-head sum-of-squares via a (2E, 2H) 0/1-indicator matmul,
        #   then broadcast the per-head rsqrt back to (tm, 2E) with its transpose.
        # Both small matmuls take compute_dtype operands (0/1 is exact in bf16);
        # accumulation and the rsqrt stay in f32 per the module spec.
        qk_c = qk.astype(compute_dtype)
        ss = jnp.dot(qk_c * qk_c, segf_ref[...],
                     preferred_element_type=jnp.float32)               # (tm, 2H)
        inv = jax.lax.rsqrt(ss + KQ_EPS)
        scale = jnp.dot(inv.astype(compute_dtype), segb_ref[...],
                        preferred_element_type=jnp.float32)            # (tm, 2E)
        qk = qk * scale

    q_ref[...] = qk[:, :e].astype(q_ref.dtype)
    k_ref[...] = qk[:, e:].astype(k_ref.dtype)


def _tpu_vmem_budget():
    """Return (vmem_limit_bytes, row-tile target) tuned to the local TPU generation."""
    try:
        cap = int(pltpu.get_tpu_info().vmem_capacity_bytes)
    except Exception:
        return None, 512                       # unknown: leave compiler default
    limit = min((cap * 3) // 4, 100 * 1024 * 1024)
    target = 256 if cap <= 64 * 1024 * 1024 else 512   # v7x (64 MiB) vs v5e/v6e (128 MiB)
    return limit, target


def _pick_block_m(m, target):
    """Sublane-aligned row tile, capped at `target`, with >=2 grid steps when m allows."""
    if m < 16:
        return m                                # single full-extent block
    bm = min(target, -(-m // 2))                # ceil(m/2) -> at least 2 grid steps
    return -(-bm // 8) * 8                      # round up to a sublane multiple


def qkv_layer(xs, w_q, w_k, w_v, ln_gain, *, num_heads, block_m=None,
              compute_dtype=jnp.bfloat16, out_dtype=None, normalize_keys=True,
              vmem_limit_bytes=None):
    """QKVLayer forward.

    xs: (B, S, E).  w_q/w_k/w_v: (E, E) in (in, out) layout (transpose of torch
    Linear.weight).  ln_gain: (E,).  Returns (q, k, v) each (B, S, H, E//H).
    """
    b, s, e = xs.shape
    h = num_heads
    dh = e // h
    m = b * s
    if out_dtype is None:
        out_dtype = xs.dtype

    auto_limit, target = _tpu_vmem_budget()
    if vmem_limit_bytes is None:
        vmem_limit_bytes = auto_limit
    if block_m is None:
        block_m = _pick_block_m(m, target)

    x2d = xs.reshape(m, e)

    # One-time constant transforms (XLA constant-folds across jitted calls):
    #  - fold the layernorm gain into the weights:  (x*g) @ W == x @ (diag(g) @ W),
    #  - fuse Q and K into one (E, 2E) weight; keep V separate,
    #  - cast to the MXU compute dtype (bf16 default, f32 accumulation).
    gain_col = ln_gain.astype(jnp.float32).reshape(e, 1)
    w_qk = (jnp.concatenate([w_q, w_k], axis=1).astype(jnp.float32)
            * gain_col).astype(compute_dtype)
    w_vv = (w_v.astype(jnp.float32) * gain_col).astype(compute_dtype)

    # 0/1 indicator matrices for per-head segmented sums over the fused [Q|K]
    # columns (2E lanes <-> 2H heads).  0/1 is exact in bf16, so build them in
    # compute_dtype so the MXU never sees f32 operands on the bf16 path.
    head_of_col = jnp.arange(2 * e, dtype=jnp.int32) // dh
    seg_fwd = (head_of_col[:, None]
               == jnp.arange(2 * h, dtype=jnp.int32)[None, :]).astype(compute_dtype)
    seg_bwd = seg_fwd.T

    kernel = functools.partial(_qkv_kernel, embed_dim=e,
                               compute_dtype=compute_dtype,
                               normalize_keys=normalize_keys)

    grid = (pl.cdiv(m, block_m),)               # partial last block is masked

    row_in = pl.BlockSpec((block_m, e), lambda i: (i, 0))
    row_out = pl.BlockSpec((block_m, e), lambda i: (i, 0))
    # Grid-invariant operands: single-buffer (nothing to prefetch across steps).
    wqk_spec = pl.BlockSpec((e, 2 * e), lambda i: (0, 0), pipeline_mode=pl.Buffered(1))
    wv_spec = pl.BlockSpec((e, e), lambda i: (0, 0), pipeline_mode=pl.Buffered(1))
    segf_spec = pl.BlockSpec((2 * e, 2 * h), lambda i: (0, 0), pipeline_mode=pl.Buffered(1))
    segb_spec = pl.BlockSpec((2 * h, 2 * e), lambda i: (0, 0), pipeline_mode=pl.Buffered(1))

    q, k, v = pl.pallas_call(
        kernel,
        out_shape=[jax.ShapeDtypeStruct((m, e), out_dtype)] * 3,
        grid_spec=pltpu.PrefetchScalarGridSpec(
            num_scalar_prefetch=0,
            grid=grid,
            in_specs=[row_in, wqk_spec, wv_spec, segf_spec, segb_spec],
            out_specs=[row_out, row_out, row_out],
        ),
        compiler_params=pltpu.CompilerParams(
            dimension_semantics=("parallel",),   # shard grid steps on v7x's 2 TCs
            vmem_limit_bytes=vmem_limit_bytes),
    )(x2d, w_qk, w_vv, seg_fwd, seg_bwd)

    shape4 = (b, s, h, dh)
    return q.reshape(shape4), k.reshape(shape4), v.reshape(shape4)


# ---------------------------- pure-JAX reference --------------------------------
def qkv_reference(xs, w_q, w_k, w_v, ln_gain, *, num_heads):
    b, s, e = xs.shape
    dh = e // num_heads
    x = xs.astype(jnp.float32)
    var = jnp.mean(x * x, axis=-1, keepdims=True)
    xn = xs * jax.lax.rsqrt(var + LN_EPS) * ln_gain
    q = (xn @ w_q).reshape(b, s, num_heads, dh)
    k = (xn @ w_k).reshape(b, s, num_heads, dh)
    v = (xn @ w_v).reshape(b, s, num_heads, dh)

    def norm(y):
        ss = jnp.sum(y * y, axis=-1, keepdims=True)
        return y * jax.lax.rsqrt(ss.astype(jnp.float32) + KQ_EPS)

    return norm(q), norm(k), v.astype(xs.dtype)


if __name__ == "__main__":
    B, S, E, H = 2, 8, 32, 4  # batch, seq, embedding_dim, num_heads

    key = jax.random.PRNGKey(0)
    kx, kq, kk, kv, kx2 = jax.random.split(key, 5)

    xs = jax.random.normal(kx, (B, S, E), dtype=jnp.float32)
    # torch Linear stores (out, in); we use the transposed (in, out) layout.
    scale = 1.0 / (E ** 0.5)
    w_q = jax.random.normal(kq, (E, E), dtype=jnp.float32) * scale
    w_k = jax.random.normal(kk, (E, E), dtype=jnp.float32) * scale
    w_v = jax.random.normal(kv, (E, E), dtype=jnp.float32) * scale
    ln_gain = jnp.ones((E,), dtype=jnp.float32)  # AGLayerNorm initializes weight to ones

    q_ref, k_ref, v_ref = qkv_reference(xs, w_q, w_k, w_v, ln_gain, num_heads=H)

    # 1) f32 compute path (module-exact semantics), explicit block_m=8 -> 2-step grid.
    q, k, v = qkv_layer(xs, w_q, w_k, w_v, ln_gain, num_heads=H,
                        block_m=8, compute_dtype=jnp.float32)
    jax.block_until_ready((q, k, v))
    assert q.shape == (B, S, H, E // H)
    assert jnp.allclose(q, q_ref, atol=1e-4, rtol=1e-4)
    assert jnp.allclose(k, k_ref, atol=1e-4, rtol=1e-4)
    assert jnp.allclose(v, v_ref, atol=1e-4, rtol=1e-4)

    # 2) Default bf16-MXU path (f32 accumulation + f32 norms), auto tiling / vmem limit.
    qb, kb, vb = qkv_layer(xs, w_q, w_k, w_v, ln_gain, num_heads=H)
    jax.block_until_ready((qb, kb, vb))
    assert jnp.allclose(qb, q_ref, atol=5e-2, rtol=5e-2)
    assert jnp.allclose(kb, k_ref, atol=5e-2, rtol=5e-2)
    assert jnp.allclose(vb, v_ref, atol=5e-2, rtol=5e-2)

    # 3) bf16 outputs (halved output HBM traffic for bandwidth-bound chips).
    qh, kh, vh = qkv_layer(xs, w_q, w_k, w_v, ln_gain, num_heads=H,
                           out_dtype=jnp.bfloat16)
    jax.block_until_ready((qh, kh, vh))
    assert qh.dtype == jnp.bfloat16 and vh.dtype == jnp.bfloat16
    assert jnp.allclose(qh.astype(jnp.float32), q_ref, atol=6e-2, rtol=6e-2)
    assert jnp.allclose(vh.astype(jnp.float32), v_ref, atol=6e-2, rtol=6e-2)

    # 4) Ragged M: S=9 -> M=18 with a masked partial last block (cdiv grid).
    xs_r = jax.random.normal(kx2, (B, 9, E), dtype=jnp.float32)
    qr_ref, kr_ref, vr_ref = qkv_reference(xs_r, w_q, w_k, w_v, ln_gain, num_heads=H)
    qr, kr, vr = qkv_layer(xs_r, w_q, w_k, w_v, ln_gain, num_heads=H,
                           compute_dtype=jnp.float32)
    jax.block_until_ready((qr, kr, vr))
    assert qr.shape == (B, 9, H, E // H)
    assert jnp.allclose(qr, qr_ref, atol=1e-4, rtol=1e-4)
    assert jnp.allclose(kr, kr_ref, atol=1e-4, rtol=1e-4)
    assert jnp.allclose(vr, vr_ref, atol=1e-4, rtol=1e-4)

    print("KERNEL_OK")
</pallas_src>

<mosaic_0001>
module attributes {stable_mosaic.version = 11 : i64} {
  func.func @_qkv_kernel(%arg0: i32, %arg1: memref<8x32xf32, #tpu.memory_space<vmem>>, %arg2: memref<32x64xf32, #tpu.memory_space<vmem>>, %arg3: memref<32x32xf32, #tpu.memory_space<vmem>>, %arg4: memref<64x8xf32, #tpu.memory_space<vmem>>, %arg5: memref<8x64xf32, #tpu.memory_space<vmem>>, %arg6: memref<8x32xf32, #tpu.memory_space<vmem>>, %arg7: memref<8x32xf32, #tpu.memory_space<vmem>>, %arg8: memref<8x32xf32, #tpu.memory_space<vmem>>) attributes {dimension_semantics = [#tpu.dimension_semantics<parallel>], iteration_bounds = array<i64: 2>, scalar_prefetch = 0 : i64, scratch_operands = 0 : i64, tpu.core_type = #tpu.core_type<tc>, window_params = [{transform_indices = @transform_0, window_bounds = array<i64: 8, 32>}, {pipeline_mode = #tpu.pipeline_mode<synchronous>, transform_indices = @transform_1, window_bounds = array<i64: 32, 64>}, {pipeline_mode = #tpu.pipeline_mode<synchronous>, transform_indices = @transform_2, window_bounds = array<i64: 32, 32>}, {pipeline_mode = #tpu.pipeline_mode<synchronous>, transform_indices = @transform_3, window_bounds = array<i64: 64, 8>}, {pipeline_mode = #tpu.pipeline_mode<synchronous>, transform_indices = @transform_4, window_bounds = array<i64: 8, 64>}, {transform_indices = @transform_5, window_bounds = array<i64: 8, 32>}, {transform_indices = @transform_6, window_bounds = array<i64: 8, 32>}, {transform_indices = @transform_7, window_bounds = array<i64: 8, 32>}]} {
    %c0 = arith.constant 0 : index
    %c0_0 = arith.constant 0 : index
    %0 = vector.load %arg1[%c0, %c0_0] : memref<8x32xf32, #tpu.memory_space<vmem>>, vector<8x32xf32>
    %1 = arith.mulf %0, %0 : vector<8x32xf32>
    %cst = arith.constant dense<0.000000e+00> : vector<8xf32>
    %2 = vector.multi_reduction <add>, %1, %cst [1] : vector<8x32xf32> to vector<8xf32>
    %3 = vector.shape_cast %2 : vector<8xf32> to vector<8x1xf32>
    %cst_1 = arith.constant 3.200000e+01 : f32
    %4 = vector.broadcast %cst_1 : f32 to vector<8x1xf32>
    %5 = arith.divf %3, %4 : vector<8x1xf32>
    %cst_2 = arith.constant 9.99999997E-7 : f32
    %6 = vector.broadcast %cst_2 : f32 to vector<8x1xf32>
    %7 = arith.addf %5, %6 : vector<8x1xf32>
    %8 = math.rsqrt %7 : vector<8x1xf32>
    %9 = vector.broadcast %8 : vector<8x1xf32> to vector<8x32xf32>
    %10 = arith.mulf %0, %9 : vector<8x32xf32>
    %c0_3 = arith.constant 0 : index
    %c0_4 = arith.constant 0 : index
    %11 = vector.load %arg3[%c0_3, %c0_4] : memref<32x32xf32, #tpu.memory_space<vmem>>, vector<32x32xf32>
    %cst_5 = arith.constant dense<0.000000e+00> : vector<8x32xf32>
    %12 = tpu.matmul %10, %11, %cst_5 {dimension_numbers = #tpu.dot_dimension_numbers<[1], [0], [0], [1], [0, 0, 1, 1], [], []>} : vector<8x32xf32>, vector<32x32xf32>, vector<8x32xf32> -> vector<8x32xf32>
    %c0_6 = arith.constant 0 : index
    %c0_7 = arith.constant 0 : index
    %13 = vector.load %arg8[%c0_6, %c0_7] : memref<8x32xf32, #tpu.memory_space<vmem>>, vector<8x32xf32>
    tpu.vector_store %arg8[%c0_6, %c0_7], %12 {strides = array<i32>} : memref<8x32xf32, #tpu.memory_space<vmem>>, vector<8x32xf32>,
    %c0_8 = arith.constant 0 : index
    %c0_9 = arith.constant 0 : index
    %14 = vector.load %arg2[%c0_8, %c0_9] : memref<32x64xf32, #tpu.memory_space<vmem>>, vector<32x64xf32>
    %cst_10 = arith.constant dense<0.000000e+00> : vector<8x64xf32>
    %15 = tpu.matmul %10, %14, %cst_10 {dimension_numbers = #tpu.dot_dimension_numbers<[1], [0], [0], [1], [0, 0, 1, 1], [], []>} : vector<8x32xf32>, vector<32x64xf32>, vector<8x64xf32> -> vector<8x64xf32>
    %16 = arith.mulf %15, %15 : vector<8x64xf32>
    %c0_11 = arith.constant 0 : index
    %c0_12 = arith.constant 0 : index
    %17 = vector.load %arg4[%c0_11, %c0_12] : memref<64x8xf32, #tpu.memory_space<vmem>>, vector<64x8xf32>
    %cst_13 = arith.constant dense<0.000000e+00> : vector<8x8xf32>
    %18 = tpu.matmul %16, %17, %cst_13 {dimension_numbers = #tpu.dot_dimension_numbers<[1], [0], [0], [1], [0, 0, 1, 1], [], []>} : vector<8x64xf32>, vector<64x8xf32>, vector<8x8xf32> -> vector<8x8xf32>
    %cst_14 = arith.constant 9.99999997E-7 : f32
    %19 = vector.broadcast %cst_14 : f32 to vector<8x8xf32>
    %20 = arith.addf %18, %19 : vector<8x8xf32>
    %21 = math.rsqrt %20 : vector<8x8xf32>
    %c0_15 = arith.constant 0 : index
    %c0_16 = arith.constant 0 : index
    %22 = vector.load %arg5[%c0_15, %c0_16] : memref<8x64xf32, #tpu.memory_space<vmem>>, vector<8x64xf32>
    %cst_17 = arith.constant dense<0.000000e+00> : vector<8x64xf32>
    %23 = tpu.matmul %21, %22, %cst_17 {dimension_numbers = #tpu.dot_dimension_numbers<[1], [0], [0], [1], [0, 0, 1, 1], [], []>} : vector<8x8xf32>, vector<8x64xf32>, vector<8x64xf32> -> vector<8x64xf32>
    %24 = arith.mulf %15, %23 : vector<8x64xf32>
    %25 = vector.extract_strided_slice %24 {offsets = [0, 0], sizes = [8, 32], strides = [1, 1]} : vector<8x64xf32> to vector<8x32xf32>
    %c0_18 = arith.constant 0 : index
    %c0_19 = arith.constant 0 : index
    %26 = vector.load %arg6[%c0_18, %c0_19] : memref<8x32xf32, #tpu.memory_space<vmem>>, vector<8x32xf32>
    tpu.vector_store %arg6[%c0_18, %c0_19], %25 {strides = array<i32>} : memref<8x32xf32, #tpu.memory_space<vmem>>, vector<8x32xf32>,
    %27 = vector.extract_strided_slice %24 {offsets = [0, 32], sizes = [8, 32], strides = [1, 1]} : vector<8x64xf32> to vector<8x32xf32>
    %c0_20 = arith.constant 0 : index
    %c0_21 = arith.constant 0 : index
    %28 = vector.load %arg7[%c0_20, %c0_21] : memref<8x32xf32, #tpu.memory_space<vmem>>, vector<8x32xf32>
    tpu.vector_store %arg7[%c0_20, %c0_21], %27 {strides = array<i32>} : memref<8x32xf32, #tpu.memory_space<vmem>>, vector<8x32xf32>,
    return
  }
  func.func @transform_0(%arg0: i32) -> (i32, i32) {
    %c0_i32 = arith.constant 0 : i32
    %c0_i32_0 = arith.constant 0 : i32
    return %arg0, %c0_i32 : i32, i32
  }
  func.func @transform_1(%arg0: i32) -> (i32, i32) {
    %c0_i32 = arith.constant 0 : i32
    %c0_i32_0 = arith.constant 0 : i32
    %c0_i32_1 = arith.constant 0 : i32
    return %c0_i32, %c0_i32_0 : i32, i32
  }
  func.func @transform_2(%arg0: i32) -> (i32, i32) {
    %c0_i32 = arith.constant 0 : i32
    %c0_i32_0 = arith.constant 0 : i32
    %c0_i32_1 = arith.constant 0 : i32
    return %c0_i32, %c0_i32_0 : i32, i32
  }
  func.func @transform_3(%arg0: i32) -> (i32, i32) {
    %c0_i32 = arith.constant 0 : i32
    %c0_i32_0 = arith.constant 0 : i32
    %c0_i32_1 = arith.constant 0 : i32
    return %c0_i32, %c0_i32_0 : i32, i32
  }
  func.func @transform_4(%arg0: i32) -> (i32, i32) {
    %c0_i32 = arith.constant 0 : i32
    %c0_i32_0 = arith.constant 0 : i32
    %c0_i32_1 = arith.constant 0 : i32
    return %c0_i32, %c0_i32_0 : i32, i32
  }
  func.func @transform_5(%arg0: i32) -> (i32, i32) {
    %c0_i32 = arith.constant 0 : i32
    %c0_i32_0 = arith.constant 0 : i32
    return %arg0, %c0_i32 : i32, i32
  }
  func.func @transform_6(%arg0: i32) -> (i32, i32) {
    %c0_i32 = arith.constant 0 : i32
    %c0_i32_0 = arith.constant 0 : i32
    return %arg0, %c0_i32 : i32, i32
  }
  func.func @transform_7(%arg0: i32) -> (i32, i32) {
    %c0_i32 = arith.constant 0 : i32
    %c0_i32_0 = arith.constant 0 : i32
    return %arg0, %c0_i32 : i32, i32
  }
}

</mosaic_0001>

<llo_original>
// kernel: tpu_custom_call.1
$region0: #{tpu_custom_call.1}
  #allocation0 [shape = 'u32[]', space=smem, size = 0x4, offset = 0x4, fixed_abs, tag = 'smem constant byte address 0x4 - core index']
  #allocation1 [shape = 'u32[144,128]{1,0:T(1,128)}', space=vmem, size = 0x12000, scoped, tag = 'internal scratch']
  %s0 = inlined_call_operand.hbm [shape: f32[16,32], index: 0, kind: input, shape index: {}]
  %s1 = inlined_call_operand.vmem [shape: f32[32,64], index: 1, kind: input, shape index: {}]
  %s2 = inlined_call_operand.vmem [shape: f32[32,32], index: 2, kind: input, shape index: {}]
  %s3 = inlined_call_operand.vmem [shape: f32[64,8], index: 3, kind: input, shape index: {}]
  %s4 = inlined_call_operand.vmem [shape: f32[8,64], index: 4, kind: input, shape index: {}]
  %s5 = inlined_call_operand.hbm [shape: f32[16,32], index: 5, kind: output, shape index: {0}]
  %s6 = inlined_call_operand.hbm [shape: f32[16,32], index: 6, kind: output, shape index: {1}]
  %s7 = inlined_call_operand.hbm [shape: f32[16,32], index: 7, kind: output, shape index: {2}]
  %8 = xla_tuple %s5, %s6, %s7
  %s9 = sld [smem:[#allocation0]]
  $region73: #{tpu_custom_call.1} parent=0
    _
  %s11 = ssub.s32 1, %s9
  %s12 = scalar_select 0, %s11, %s9
  $region1: #{tpu_custom_call.1} parent=0
    #allocation2 [shape = 'u8[8192]{0}', space=vmem, size = 0x2000, scoped, tag = 'input window, operand 0']
    #allocation3 [shape = 's32[2]{0}', space=sflag, size = 0x8, scoped, tag = 'scoped memory for tpu_custom_call.1']
    #allocation4 [shape = 's32[2]{0}', space=sflag, size = 0x8, scoped, tag = 'scoped memory for tpu_custom_call.1']
    #allocation5 [shape = 'u8[8192]{0}', space=vmem, size = 0x2000, scoped, tag = 'output window, operand 0']
    #allocation6 [shape = 'u8[8192]{0}', space=vmem, size = 0x2000, scoped, tag = 'output window, operand 1']
    #allocation7 [shape = 's32[2]{0}', space=sflag, size = 0x8, scoped, tag = 'scoped memory for tpu_custom_call.1']
    #allocation8 [shape = 'u8[8192]{0}', space=vmem, size = 0x2000, scoped, tag = 'output window, operand 2']
    %13 = vsyncpa [#allocation3], 0
    %s14 = scalar_lea.sflag [#allocation3], 1
    %15 = vsyncpa %s14, 0
    %16 = vsyncpa [#allocation4], 0
    %s17 = scalar_lea.sflag [#allocation4], 1
    %18 = vsyncpa %s17, 0
    %19 = vsyncpa [#allocation7], 0
    %s20 = scalar_lea.sflag [#allocation7], 1
    %21 = vsyncpa %s20, 0
    loop: start=0, step=1, limit=4
    $region2: #{tpu_custom_call.1} parent=1 // loop_pre_header
      _
    $region3: #{tpu_custom_call.1} parent=1 // loop_header
      %s23 = sphi 0, %s27
      %p24 = scmp.ge.s32.totalorder %s23, 4
      %s33 = sphi 0, %s35
      %s36 = sphi 0, %s33
      %s37 = sphi 0, %s36
      %s53 = sphi 0, %s37
      %s57 = sphi 0, %s57
      %s59 = sphi 0, %s57
      %s60 = sphi 0, %s59
      %s74 = sphi 0, %s60
      %s78 = sphi 0, %s78
      %s80 = sphi 0, %s78
      %s81 = sphi 0, %s80
      %s95 = sphi 0, %s81
      %s99 = sphi 0, %s99
      %s101 = sphi 0, %s99
      %s102 = sphi 0, %s101
      %s116 = sphi 0, %s102
      %s120 = sphi 0, %s120
      %s122 = sphi 0, %s120
      %s123 = sphi 0, %s122
      %s137 = sphi 0, %s123
      %s143 = sphi 0, %s145
      %s146 = sphi 0, %s143
      %s147 = sphi 0, %s146
      %s163 = sphi 0, %s147
      %s169 = sphi 0, %s171
      %s172 = sphi 0, %s169
      %s173 = sphi 0, %s172
      %s189 = sphi 0, %s173
      %s195 = sphi 0, %s197
      %s198 = sphi 0, %s195
      %s199 = sphi 0, %s198
      %s215 = sphi 0, %s199
    $region4: #{tpu_custom_call.1} parent=1 // loop_header_branch
      %26 = sbr.rel (%p24) target = $region8
    $region5: #{tpu_custom_call.1} parent=1 // loop_body
      %s28 = ssub.s32 %s23, 1
      %s29 = ssub.s32 %s23, 2
      %s30 = sadd.s32 %s23, 1
      %s31 = ssub.s32 %s23, %s30
      %p32 = scmp.eq.s32.totalorder %s31, 0
      %s34 = sadd.s32 %s33, 1
      %s35 = scalar_select %p32, %s33, %s34
      %p38 = pneg %p32
      %p39 = scmp.eq.s32.totalorder %s23, 1
      %p40 = por %p38, %p39
      %p41 = scmp.ne.s32.totalorder %s33, %s36
      %p42 = scmp.eq.s32.totalorder %s23, 0
      %p43 = por %p41, %p42
      %p44 = scmp.ne.s32.totalorder %s33, %s36
      %p45 = scmp.eq.s32.totalorder %s28, 1
      %p46 = por %p44, %p45
      %p47 = scmp.ne.s32.totalorder %s36, %s37
      %p48 = scmp.eq.s32.totalorder %s28, 0
      %p49 = por %p47, %p48
      %p50 = scmp.ne.s32.totalorder %s36, %s37
      %p51 = scmp.eq.s32.totalorder %s29, 1
      %p52 = por %p50, %p51
      %p54 = scmp.ne.s32.totalorder %s37, %s53
      %p55 = scmp.eq.s32.totalorder %s29, 0
      %p56 = por %p54, %p55
      %s58 = sadd.s32 %s57, 1
      %p61 = scmp.eq.s32.totalorder %s23, 1
      %p62 = scmp.ne.s32.totalorder %s57, %s59
      %p63 = scmp.eq.s32.totalorder %s23, 0
      %p64 = por %p62, %p63
      %p65 = scmp.ne.s32.totalorder %s57, %s59
      %p66 = scmp.eq.s32.totalorder %s28, 1
      %p67 = por %p65, %p66
      %p68 = scmp.ne.s32.totalorder %s59, %s60
      %p69 = scmp.eq.s32.totalorder %s28, 0
      %p70 = por %p68, %p69
      %p71 = scmp.ne.s32.totalorder %s59, %s60
      %p72 = scmp.eq.s32.totalorder %s29, 1
      %p73 = por %p71, %p72
      %p75 = scmp.ne.s32.totalorder %s60, %s74
      %p76 = scmp.eq.s32.totalorder %s29, 0
      %p77 = por %p75, %p76
      %s79 = sadd.s32 %s78, 1
      %p82 = scmp.eq.s32.totalorder %s23, 1
      %p83 = scmp.ne.s32.totalorder %s78, %s80
      %p84 = scmp.eq.s32.totalorder %s23, 0
      %p85 = por %p83, %p84
      %p86 = scmp.ne.s32.totalorder %s78, %s80
      %p87 = scmp.eq.s32.totalorder %s28, 1
      %p88 = por %p86, %p87
      %p89 = scmp.ne.s32.totalorder %s80, %s81
      %p90 = scmp.eq.s32.totalorder %s28, 0
      %p91 = por %p89, %p90
      %p92 = scmp.ne.s32.totalorder %s80, %s81
      %p93 = scmp.eq.s32.totalorder %s29, 1
      %p94 = por %p92, %p93
      %p96 = scmp.ne.s32.totalorder %s81, %s95
      %p97 = scmp.eq.s32.totalorder %s29, 0
      %p98 = por %p96, %p97
      %s100 = sadd.s32 %s99, 1
      %p103 = scmp.eq.s32.totalorder %s23, 1
      %p104 = scmp.ne.s32.totalorder %s99, %s101
      %p105 = scmp.eq.s32.totalorder %s23, 0
      %p106 = por %p104, %p105
      %p107 = scmp.ne.s32.totalorder %s99, %s101
      %p108 = scmp.eq.s32.totalorder %s28, 1
      %p109 = por %p107, %p108
      %p110 = scmp.ne.s32.totalorder %s101, %s102
      %p111 = scmp.eq.s32.totalorder %s28, 0
      %p112 = por %p110, %p111
      %p113 = scmp.ne.s32.totalorder %s101, %s102
      %p114 = scmp.eq.s32.totalorder %s29, 1
      %p115 = por %p113, %p114
      %p117 = scmp.ne.s32.totalorder %s102, %s116
      %p118 = scmp.eq.s32.totalorder %s29, 0
      %p119 = por %p117, %p118
      %s121 = sadd.s32 %s120, 1
      %p124 = scmp.eq.s32.totalorder %s23, 1
      %p125 = scmp.ne.s32.totalorder %s120, %s122
      %p126 = scmp.eq.s32.totalorder %s23, 0
      %p127 = por %p125, %p126
      %p128 = scmp.ne.s32.totalorder %s120, %s122
      %p129 = scmp.eq.s32.totalorder %s28, 1
      %p130 = por %p128, %p129
      %p131 = scmp.ne.s32.totalorder %s122, %s123
      %p132 = scmp.eq.s32.totalorder %s28, 0
      %p133 = por %p131, %p132
      %p134 = scmp.ne.s32.totalorder %s122, %s123
      %p135 = scmp.eq.s32.totalorder %s29, 1
      %p136 = por %p134, %p135
      %p138 = scmp.ne.s32.totalorder %s123, %s137
      %p139 = scmp.eq.s32.totalorder %s29, 0
      %p140 = por %p138, %p139
      %s141 = ssub.s32 %s23, %s30
      %p142 = scmp.eq.s32.totalorder %s141, 0
      %s144 = sadd.s32 %s143, 1
      %s145 = scalar_select %p142, %s143, %s144
      %p148 = pneg %p142
      %p149 = scmp.eq.s32.totalorder %s23, 1
      %p150 = por %p148, %p149
      %p151 = scmp.ne.s32.totalorder %s143, %s146
      %p152 = scmp.eq.s32.totalorder %s23, 0
      %p153 = por %p151, %p152
      %p154 = scmp.ne.s32.totalorder %s143, %s146
      %p155 = scmp.eq.s32.totalorder %s28, 1
      %p156 = por %p154, %p155
      %p157 = scmp.ne.s32.totalorder %s146, %s147
      %p158 = scmp.eq.s32.totalorder %s28, 0
      %p159 = por %p157, %p158
      %p160 = scmp.ne.s32.totalorder %s146, %s147
      %p161 = scmp.eq.s32.totalorder %s29, 1
      %p162 = por %p160, %p161
      %p164 = scmp.ne.s32.totalorder %s147, %s163
      %p165 = scmp.eq.s32.totalorder %s29, 0
      %p166 = por %p164, %p165
      %s167 = ssub.s32 %s23, %s30
      %p168 = scmp.eq.s32.totalorder %s167, 0
      %s170 = sadd.s32 %s169, 1
      %s171 = scalar_select %p168, %s169, %s170
      %p174 = pneg %p168
      %p175 = scmp.eq.s32.totalorder %s23, 1
      %p176 = por %p174, %p175
      %p177 = scmp.ne.s32.totalorder %s169, %s172
      %p178 = scmp.eq.s32.totalorder %s23, 0
      %p179 = por %p177, %p178
      %p180 = scmp.ne.s32.totalorder %s169, %s172
      %p181 = scmp.eq.s32.totalorder %s28, 1
      %p182 = por %p180, %p181
      %p183 = scmp.ne.s32.totalorder %s172, %s173
      %p184 = scmp.eq.s32.totalorder %s28, 0
      %p185 = por %p183, %p184
      %p186 = scmp.ne.s32.totalorder %s172, %s173
      %p187 = scmp.eq.s32.totalorder %s29, 1
      %p188 = por %p186, %p187
      %p190 = scmp.ne.s32.totalorder %s173, %s189
      %p191 = scmp.eq.s32.totalorder %s29, 0
      %p192 = por %p190, %p191
      %s193 = ssub.s32 %s23, %s30
      %p194 = scmp.eq.s32.totalorder %s193, 0
      %s196 = sadd.s32 %s195, 1
      %s197 = scalar_select %p194, %s195, %s196
      %p200 = pneg %p194
      %p201 = scmp.eq.s32.totalorder %s23, 1
      %p202 = por %p200, %p201
      %p203 = scmp.ne.s32.totalorder %s195, %s198
      %p204 = scmp.eq.s32.totalorder %s23, 0
      %p205 = por %p203, %p204
      %p206 = scmp.ne.s32.totalorder %s195, %s198
      %p207 = scmp.eq.s32.totalorder %s28, 1
      %p208 = por %p206, %p207
      %p209 = scmp.ne.s32.totalorder %s198, %s199
      %p210 = scmp.eq.s32.totalorder %s28, 0
      %p211 = por %p209, %p210
      %p212 = scmp.ne.s32.totalorder %s198, %s199
      %p213 = scmp.eq.s32.totalorder %s29, 1
      %p214 = por %p212, %p213
      %p216 = scmp.ne.s32.totalorder %s199, %s215
      %p217 = scmp.eq.s32.totalorder %s29, 0
      %p218 = por %p216, %p217
      %p219 = scmp.le.s32.totalorder 1, %s23
      %p220 = scmp.lt.s32.totalorder %s23, 3
      %p221 = pnand %p219, %p220
      %p222 = pneg %p221
      // Predicated region
      $region9: #{tpu_custom_call.1} parent=5 // pred_check
        _
      $region10: #{tpu_custom_call.1} parent=5 // pred_check_branch
        %224 = sbr.rel (%p221) target = $region12
      $region11: #{tpu_custom_call.1} parent=5 // pred_region
        %s225 = ssub.s32 %s23, 1
        // Predicated region
        $region13: #{tpu_custom_call.1} parent=11 // pred_check
          %p226 = pneg %p70
        $region14: #{tpu_custom_call.1} parent=11 // pred_check_branch
          %228 = sbr.rel (%p226) target = $region16
        $region15: #{tpu_custom_call.1} parent=11 // pred_region
          _
        $region16: #{tpu_custom_call.1} parent=11 // pred_fallthru
          _
        // Predicated region
        $region17: #{tpu_custom_call.1} parent=11 // pred_check
          %p229 = pneg %p91
        $region18: #{tpu_custom_call.1} parent=11 // pred_check_branch
          %231 = sbr.rel (%p229) target = $region20
        $region19: #{tpu_custom_call.1} parent=11 // pred_region
          _
        $region20: #{tpu_custom_call.1} parent=11 // pred_fallthru
          _
        // Predicated region
        $region21: #{tpu_custom_call.1} parent=11 // pred_check
          %p232 = pneg %p112
        $region22: #{tpu_custom_call.1} parent=11 // pred_check_branch
          %234 = sbr.rel (%p232) target = $region24
        $region23: #{tpu_custom_call.1} parent=11 // pred_region
          _
        $region24: #{tpu_custom_call.1} parent=11 // pred_fallthru
          _
        // Predicated region
        $region25: #{tpu_custom_call.1} parent=11 // pred_check
          %p235 = pneg %p133
        $region26: #{tpu_custom_call.1} parent=11 // pred_check_branch
          %237 = sbr.rel (%p235) target = $region28
        $region27: #{tpu_custom_call.1} parent=11 // pred_region
          _
        $region28: #{tpu_custom_call.1} parent=11 // pred_fallthru
          _
      $region12: #{tpu_custom_call.1} parent=5 // pred_fallthru
        _
      %p238 = scmp.lt.s32.totalorder %s23, 2
      // Predicated region
      $region29: #{tpu_custom_call.1} parent=5 // pred_check
        %p239 = pneg %p238
      $region30: #{tpu_custom_call.1} parent=5 // pred_check_branch
        %241 = sbr.rel (%p239) target = $region32
      $region31: #{tpu_custom_call.1} parent=5 // pred_region
        // Predicated region
        $region33: #{tpu_custom_call.1} parent=31 // pred_check
          %p242 = pneg %p43
        $region34: #{tpu_custom_call.1} parent=31 // pred_check_branch
          %244 = sbr.rel (%p242) target = $region36
        $region35: #{tpu_custom_call.1} parent=31 // pred_region
          %s245 = sand.u32 %s33, 1
          %s246 = scalar_lea.sflag [#allocation3], %s245
          %s247 = sand.u32 %s33, 1
          %s248 = smul.addr %s247, 8
          %s249 = scalar_lea.vmem [#allocation2], %s248
          %s251 = ssub.s32 128, 128
          %252 = vsyncadd %s246, %s251
          %s253 = smul.addr %s23, 128
          %s254 = scalar_lea.hbm %s0, %s253
          %s256 = sshll.u32 %s249, 4
          %s257 = int_to_ptr.vmem [resolvable:$true] %s256
          %259 = dma.hbm_to_vmem [thread:$0]  %s254, 128, %s257, %s246
        $region36: #{tpu_custom_call.1} parent=31 // pred_fallthru
          _
      $region32: #{tpu_custom_call.1} parent=5 // pred_fallthru
        _
      %p260 = scmp.le.s32.totalorder 1, %s23
      %p261 = scmp.lt.s32.totalorder %s23, 3
      %p262 = pnand %p260, %p261
      %p263 = pneg %p262
      // Predicated region
      $region37: #{tpu_custom_call.1} parent=5 // pred_check
        _
      $region38: #{tpu_custom_call.1} parent=5 // pred_check_branch
        %265 = sbr.rel (%p262) target = $region40
      $region39: #{tpu_custom_call.1} parent=5 // pred_region
        %s266 = ssub.s32 %s23, 1
        %s267 = sand.u32 %s36, 1
        %s268 = scalar_lea.sflag [#allocation3], %s267
        %s269 = sand.u32 %s36, 1
        %s270 = smul.addr %s269, 8
        %s271 = scalar_lea.vmem [#allocation2], %s270
        // Predicated region
        $region41: #{tpu_custom_call.1} parent=39 // pred_check
          %p272 = pneg %p49
        $region42: #{tpu_custom_call.1} parent=39 // pred_check_branch
          %274 = sbr.rel (%p272) target = $region44
        $region43: #{tpu_custom_call.1} parent=39 // pred_region
          %275 = dma.done %s268, 128
        $region44: #{tpu_custom_call.1} parent=39 // pred_fallthru
          _
        %s276 = sand.u32 %s36, 1
        %s277 = scalar_lea.sflag [#allocation3], %s276
        %s278 = sand.u32 %s36, 1
        %s279 = smul.addr %s278, 8
        %s280 = scalar_lea.vmem [#allocation2], %s279
        %p281 = pneg %p49
        %p282 = pneg %p46
        %p283 = pneg %p70
        %p284 = pneg %p67
        %p285 = pneg %p91
        %p286 = pneg %p88
        %p287 = pneg %p112
        %p288 = pneg %p109
        %p289 = pneg %p133
        %p290 = pneg %p130
        %p291 = pneg %p159
        %p292 = pneg %p156
        %s293 = sand.u32 %s146, 1
        %s294 = scalar_lea.sflag [#allocation4], %s293
        %s295 = sand.u32 %s146, 1
        %s296 = smul.addr %s295, 8
        %s297 = scalar_lea.vmem [#allocation5], %s296
        %p298 = pneg %p185
        %p299 = pneg %p182
        %s300 = sand.u32 %s28, 1
        %s301 = scalar_lea.sflag [#allocation7], %s300
        %s302 = sand.u32 %s172, 1
        %s303 = smul.addr %s302, 8
        %s304 = scalar_lea.vmem [#allocation6], %s303
        %p305 = pneg %p211
        %p306 = pneg %p208
        %s307 = sand.u32 %s28, 1
        %s308 = scalar_lea.sflag [#allocation7], %s307
        %s309 = sand.u32 %s198, 1
        %s310 = smul.addr %s309, 8
        %s311 = scalar_lea.vmem [#allocation8], %s310
        %v312 = vld [vmem:[%s271] sm:$0xff]
        %v313 = vmul.f32 %v312, %v312
        %vm314 = vcmask 261120
        %v315 = vsel %vm314, %v313, 0.0
        %316 = vadd.xlane.f32.xlu0 %v315
        %v317 = vpop.xlane.xlu0 %316
        %v318 = vrcp.pop 32.0
        %v319 = vmul.f32 %v317, %v318
        %v320 = vadd.f32 %v319, 1e-06
        %v321 = vrsqrt.pop %v320
        %v322 = vmul.f32 %v312, %v321
        %v323 = vld [vmem:[%s2] sm:$0xff]
        %v324 = vld [vmem:[%s2 + $0x8] sm:$0xff]
        %v325 = vld [vmem:[%s2 + $0x10] sm:$0xff]
        %v326 = vld [vmem:[%s2 + $0x18] sm:$0xff]
        %v328 = vsel %vm314, %v322, 0
        %330 = vmatprep.subr.mxu0 0.0
        %331 = vmatpush1.msra.mxu0 0.0
        %332 = vmatprep.subr.mxu0 0.0
        %333 = vmatpush1.msra.mxu0 0.0
        %334 = vmatprep.subr.mxu0 0.0
        %335 = vmatpush1.msra.mxu0 0.0
        %336 = vmatprep.subr.mxu0 0.0
        %337 = vmatpush1.msra.mxu0 0.0
        %338 = vmatprep.subr.mxu0 0.0
        %339 = vmatpush1.msra.mxu0 0.0
        %340 = vmatprep.subr.mxu0 0.0
        %341 = vmatpush1.msra.mxu0 0.0
        %342 = vmatprep.subr.mxu0 0.0
        %343 = vmatpush1.msra.mxu0 0.0
        %344 = vmatprep.subr.mxu0 0.0
        %345 = vmatpush1.msra.mxu0 0.0
        %346 = vmatprep.subr.mxu0 0.0
        %347 = vmatpush1.msra.mxu0 0.0
        %348 = vmatprep.subr.mxu0 0.0
        %349 = vmatpush1.msra.mxu0 0.0
        %350 = vmatprep.subr.mxu0 0.0
        %351 = vmatpush1.msra.mxu0 0.0
        %352 = vmatprep.subr.mxu0 0.0
        %353 = vmatpush1.msra.mxu0 0.0
        %354 = vmatprep.subr.mxu0 0.0
        %355 = vmatpush1.msra.mxu0 %v326
        %356 = vmatprep.subr.mxu0 0.0
        %357 = vmatpush1.msra.mxu0 %v325
        %358 = vmatprep.subr.mxu0 0.0
        %359 = vmatpush1.msra.mxu0 %v324
        %360 = vmatprep.subr.mxu0 0.0
        %361 = vmatpush1.msra.mxu0 %v323
        %362 = vmatprep.subr.mxu0 0.0
        %363 = vmatpush2.msra.mxu0 0.0
        %364 = vmatprep.subr.mxu0 0.0
        %365 = vmatpush2.msra.mxu0 0.0
        %366 = vmatprep.subr.mxu0 0.0
        %367 = vmatpush2.msra.mxu0 0.0
        %368 = vmatprep.subr.mxu0 0.0
        %369 = vmatpush2.msra.mxu0 0.0
        %370 = vmatprep.subr.mxu0 0.0
        %371 = vmatpush2.msra.mxu0 0.0
        %372 = vmatprep.subr.mxu0 0.0
        %373 = vmatpush2.msra.mxu0 0.0
        %374 = vmatprep.subr.mxu0 0.0
        %375 = vmatpush2.msra.mxu0 0.0
        %376 = vmatprep.subr.mxu0 0.0
        %377 = vmatpush2.msra.mxu0 0.0
        %378 = vmatprep.subr.mxu0 0.0
        %379 = vmatpush2.msra.mxu0 0.0
        %380 = vmatprep.subr.mxu0 0.0
        %381 = vmatpush2.msra.mxu0 0.0
        %382 = vmatprep.subr.mxu0 0.0
        %383 = vmatpush2.msra.mxu0 0.0
        %384 = vmatprep.subr.mxu0 0.0
        %385 = vmatpush2.msra.mxu0 0.0
        %386 = vmatprep.subr.mxu0 0.0
        %387 = vmatpush2.msra.mxu0 0.0
        %388 = vmatprep.subr.mxu0 0.0
        %389 = vmatpush2.msra.mxu0 0.0
        %390 = vmatprep.subr.mxu0 0.0
        %391 = vmatpush2.msra.mxu0 0.0
        %392 = vmatprep.subr.mxu0 0.0
        %393 = vmatpush2.msra.mxu0 0.0
        %394 = vmatprep.mubr.f32.mxu0 0.0
        %395 = vmatmul.mubr.f32.gmra.mxu0 %v328
        %v396 = vpop.f32.mrf.mxu0
        %v397 = vadd.f32 0.0, %v396
        %v398 = vpop.f32.mrf.mxu0
        %399 = vdwg.mxu0
        %400 = vst.msk [vmem:[%s311] sm:$0xff] %vm314, %v397
        %v401 = vld [vmem:[%s1] sm:$0xff]
        %v402 = vld [vmem:[%s1 + $0x8] sm:$0xff]
        %v403 = vld [vmem:[%s1 + $0x10] sm:$0xff]
        %v404 = vld [vmem:[%s1 + $0x18] sm:$0xff]
        %405 = vmatprep.subr.mxu0 0.0
        %406 = vmatpush1.msra.mxu0 0.0
        %407 = vmatprep.subr.mxu0 0.0
        %408 = vmatpush1.msra.mxu0 0.0
        %409 = vmatprep.subr.mxu0 0.0
        %410 = vmatpush1.msra.mxu0 0.0
        %411 = vmatprep.subr.mxu0 0.0
        %412 = vmatpush1.msra.mxu0 0.0
        %413 = vmatprep.subr.mxu0 0.0
        %414 = vmatpush1.msra.mxu0 0.0
        %415 = vmatprep.subr.mxu0 0.0
        %416 = vmatpush1.msra.mxu0 0.0
        %417 = vmatprep.subr.mxu0 0.0
        %418 = vmatpush1.msra.mxu0 0.0
        %419 = vmatprep.subr.mxu0 0.0
        %420 = vmatpush1.msra.mxu0 0.0
        %421 = vmatprep.subr.mxu0 0.0
        %422 = vmatpush1.msra.mxu0 0.0
        %423 = vmatprep.subr.mxu0 0.0
        %424 = vmatpush1.msra.mxu0 0.0
        %425 = vmatprep.subr.mxu0 0.0
        %426 = vmatpush1.msra.mxu0 0.0
        %427 = vmatprep.subr.mxu0 0.0
        %428 = vmatpush1.msra.mxu0 0.0
        %429 = vmatprep.subr.mxu0 0.0
        %430 = vmatpush1.msra.mxu0 %v404
        %431 = vmatprep.subr.mxu0 0.0
        %432 = vmatpush1.msra.mxu0 %v403
        %433 = vmatprep.subr.mxu0 0.0
        %434 = vmatpush1.msra.mxu0 %v402
        %435 = vmatprep.subr.mxu0 0.0
        %436 = vmatpush1.msra.mxu0 %v401
        %437 = vmatprep.subr.mxu0 0.0
        %438 = vmatpush2.msra.mxu0 0.0
        %439 = vmatprep.subr.mxu0 0.0
        %440 = vmatpush2.msra.mxu0 0.0
        %441 = vmatprep.subr.mxu0 0.0
        %442 = vmatpush2.msra.mxu0 0.0
        %443 = vmatprep.subr.mxu0 0.0
        %444 = vmatpush2.msra.mxu0 0.0
        %445 = vmatprep.subr.mxu0 0.0
        %446 = vmatpush2.msra.mxu0 0.0
        %447 = vmatprep.subr.mxu0 0.0
        %448 = vmatpush2.msra.mxu0 0.0
        %449 = vmatprep.subr.mxu0 0.0
        %450 = vmatpush2.msra.mxu0 0.0
        %451 = vmatprep.subr.mxu0 0.0
        %452 = vmatpush2.msra.mxu0 0.0
        %453 = vmatprep.subr.mxu0 0.0
        %454 = vmatpush2.msra.mxu0 0.0
        %455 = vmatprep.subr.mxu0 0.0
        %456 = vmatpush2.msra.mxu0 0.0
        %457 = vmatprep.subr.mxu0 0.0
        %458 = vmatpush2.msra.mxu0 0.0
        %459 = vmatprep.subr.mxu0 0.0
        %460 = vmatpush2.msra.mxu0 0.0
        %461 = vmatprep.subr.mxu0 0.0
        %462 = vmatpush2.msra.mxu0 0.0
        %463 = vmatprep.subr.mxu0 0.0
        %464 = vmatpush2.msra.mxu0 0.0
        %465 = vmatprep.subr.mxu0 0.0
        %466 = vmatpush2.msra.mxu0 0.0
        %467 = vmatprep.subr.mxu0 0.0
        %468 = vmatpush2.msra.mxu0 0.0
        %469 = vmatprep.mubr.f32.mxu0 0.0
        %470 = vmatmul.mubr.f32.gmra.mxu0 %v328
        %v471 = vpop.f32.mrf.mxu0
        %v472 = vadd.f32 0.0, %v471
        %v473 = vpop.f32.mrf.mxu0
        %474 = vdwg.mxu0
        %v475 = vmul.f32 %v472, %v472
        %v476 = vld [vmem:[%s3] sm:$0xff]
        %v477 = vld [vmem:[%s3 + $0x8] sm:$0xff]
        %v478 = vld [vmem:[%s3 + $0x10] sm:$0xff]
        %v479 = vld [vmem:[%s3 + $0x18] sm:$0xff]
        %v480 = vld [vmem:[%s3 + $0x20] sm:$0xff]
        %v481 = vld [vmem:[%s3 + $0x28] sm:$0xff]
        %v482 = vld [vmem:[%s3 + $0x30] sm:$0xff]
        %v483 = vld [vmem:[%s3 + $0x38] sm:$0xff]
        %vm484 = vcmask 523264
        %v486 = vsel %vm484, %v475, 0
        %488 = vmatprep.subr.mxu0 0.0
        %489 = vmatpush1.msra.mxu0 0.0
        %490 = vmatprep.subr.mxu0 0.0
        %491 = vmatpush1.msra.mxu0 0.0
        %492 = vmatprep.subr.mxu0 0.0
        %493 = vmatpush1.msra.mxu0 0.0
        %494 = vmatprep.subr.mxu0 0.0
        %495 = vmatpush1.msra.mxu0 0.0
        %496 = vmatprep.subr.mxu0 0.0
        %497 = vmatpush1.msra.mxu0 0.0
        %498 = vmatprep.subr.mxu0 0.0
        %499 = vmatpush1.msra.mxu0 0.0
        %500 = vmatprep.subr.mxu0 0.0
        %501 = vmatpush1.msra.mxu0 0.0
        %502 = vmatprep.subr.mxu0 0.0
        %503 = vmatpush1.msra.mxu0 0.0
        %504 = vmatprep.subr.mxu0 0.0
        %505 = vmatpush1.msra.mxu0 %v483
        %506 = vmatprep.subr.mxu0 0.0
        %507 = vmatpush1.msra.mxu0 %v482
        %508 = vmatprep.subr.mxu0 0.0
        %509 = vmatpush1.msra.mxu0 %v481
        %510 = vmatprep.subr.mxu0 0.0
        %511 = vmatpush1.msra.mxu0 %v480
        %512 = vmatprep.subr.mxu0 0.0
        %513 = vmatpush1.msra.mxu0 %v479
        %514 = vmatprep.subr.mxu0 0.0
        %515 = vmatpush1.msra.mxu0 %v478
        %516 = vmatprep.subr.mxu0 0.0
        %517 = vmatpush1.msra.mxu0 %v477
        %518 = vmatprep.subr.mxu0 0.0
        %519 = vmatpush1.msra.mxu0 %v476
        %520 = vmatprep.subr.mxu0 0.0
        %521 = vmatpush2.msra.mxu0 0.0
        %522 = vmatprep.subr.mxu0 0.0
        %523 = vmatpush2.msra.mxu0 0.0
        %524 = vmatprep.subr.mxu0 0.0
        %525 = vmatpush2.msra.mxu0 0.0
        %526 = vmatprep.subr.mxu0 0.0
        %527 = vmatpush2.msra.mxu0 0.0
        %528 = vmatprep.subr.mxu0 0.0
        %529 = vmatpush2.msra.mxu0 0.0
        %530 = vmatprep.subr.mxu0 0.0
        %531 = vmatpush2.msra.mxu0 0.0
        %532 = vmatprep.subr.mxu0 0.0
        %533 = vmatpush2.msra.mxu0 0.0
        %534 = vmatprep.subr.mxu0 0.0
        %535 = vmatpush2.msra.mxu0 0.0
        %536 = vmatprep.subr.mxu0 0.0
        %537 = vmatpush2.msra.mxu0 0.0
        %538 = vmatprep.subr.mxu0 0.0
        %539 = vmatpush2.msra.mxu0 0.0
        %540 = vmatprep.subr.mxu0 0.0
        %541 = vmatpush2.msra.mxu0 0.0
        %542 = vmatprep.subr.mxu0 0.0
        %543 = vmatpush2.msra.mxu0 0.0
        %544 = vmatprep.subr.mxu0 0.0
        %545 = vmatpush2.msra.mxu0 0.0
        %546 = vmatprep.subr.mxu0 0.0
        %547 = vmatpush2.msra.mxu0 0.0
        %548 = vmatprep.subr.mxu0 0.0
        %549 = vmatpush2.msra.mxu0 0.0
        %550 = vmatprep.subr.mxu0 0.0
        %551 = vmatpush2.msra.mxu0 0.0
        %552 = vmatprep.mubr.f32.mxu0 0.0
        %553 = vmatmul.mubr.f32.gmra.mxu0 %v486
        %v554 = vpop.f32.mrf.mxu0
        %v555 = vadd.f32 1e-06, %v554
        %v556 = vpop.f32.mrf.mxu0
        %557 = vdwg.mxu0
        %v558 = vrsqrt.pop %v555
        %v559 = vld [vmem:[%s4] sm:$0xff]
        %vm560 = vcmask 64512
        %v562 = vsel %vm560, %v558, 0
        %564 = vmatprep.subr.mxu0 0.0
        %565 = vmatpush1.msra.mxu0 0.0
        %566 = vmatprep.subr.mxu0 0.0
        %567 = vmatpush1.msra.mxu0 0.0
        %568 = vmatprep.subr.mxu0 0.0
        %569 = vmatpush1.msra.mxu0 0.0
        %570 = vmatprep.subr.mxu0 0.0
        %571 = vmatpush1.msra.mxu0 0.0
        %572 = vmatprep.subr.mxu0 0.0
        %573 = vmatpush1.msra.mxu0 0.0
        %574 = vmatprep.subr.mxu0 0.0
        %575 = vmatpush1.msra.mxu0 0.0
        %576 = vmatprep.subr.mxu0 0.0
        %577 = vmatpush1.msra.mxu0 0.0
        %578 = vmatprep.subr.mxu0 0.0
        %579 = vmatpush1.msra.mxu0 0.0
        %580 = vmatprep.subr.mxu0 0.0
        %581 = vmatpush1.msra.mxu0 0.0
        %582 = vmatprep.subr.mxu0 0.0
        %583 = vmatpush1.msra.mxu0 0.0
        %584 = vmatprep.subr.mxu0 0.0
        %585 = vmatpush1.msra.mxu0 0.0
        %586 = vmatprep.subr.mxu0 0.0
        %587 = vmatpush1.msra.mxu0 0.0
        %588 = vmatprep.subr.mxu0 0.0
        %589 = vmatpush1.msra.mxu0 0.0
        %590 = vmatprep.subr.mxu0 0.0
        %591 = vmatpush1.msra.mxu0 0.0
        %592 = vmatprep.subr.mxu0 0.0
        %593 = vmatpush1.msra.mxu0 0.0
        %594 = vmatprep.subr.mxu0 0.0
        %595 = vmatpush1.msra.mxu0 %v559
        %596 = vmatprep.subr.mxu0 0.0
        %597 = vmatpush2.msra.mxu0 0.0
        %598 = vmatprep.subr.mxu0 0.0
        %599 = vmatpush2.msra.mxu0 0.0
        %600 = vmatprep.subr.mxu0 0.0
        %601 = vmatpush2.msra.mxu0 0.0
        %602 = vmatprep.subr.mxu0 0.0
        %603 = vmatpush2.msra.mxu0 0.0
        %604 = vmatprep.subr.mxu0 0.0
        %605 = vmatpush2.msra.mxu0 0.0
        %606 = vmatprep.subr.mxu0 0.0
        %607 = vmatpush2.msra.mxu0 0.0
        %608 = vmatprep.subr.mxu0 0.0
        %609 = vmatpush2.msra.mxu0 0.0
        %610 = vmatprep.subr.mxu0 0.0
        %611 = vmatpush2.msra.mxu0 0.0
        %612 = vmatprep.subr.mxu0 0.0
        %613 = vmatpush2.msra.mxu0 0.0
        %614 = vmatprep.subr.mxu0 0.0
        %615 = vmatpush2.msra.mxu0 0.0
        %616 = vmatprep.subr.mxu0 0.0
        %617 = vmatpush2.msra.mxu0 0.0
        %618 = vmatprep.subr.mxu0 0.0
        %619 = vmatpush2.msra.mxu0 0.0
        %620 = vmatprep.subr.mxu0 0.0
        %621 = vmatpush2.msra.mxu0 0.0
        %622 = vmatprep.subr.mxu0 0.0
        %623 = vmatpush2.msra.mxu0 0.0
        %624 = vmatprep.subr.mxu0 0.0
        %625 = vmatpush2.msra.mxu0 0.0
        %626 = vmatprep.subr.mxu0 0.0
        %627 = vmatpush2.msra.mxu0 0.0
        %628 = vmatprep.mubr.f32.mxu0 0.0
        %629 = vmatmul.mubr.f32.gmra.mxu0 %v562
        %v630 = vpop.f32.mrf.mxu0
        %v631 = vadd.f32 0.0, %v630
        %v632 = vpop.f32.mrf.mxu0
        %633 = vdwg.mxu0
        %v634 = vmul.f32 %v472, %v631
        %635 = vst.msk [vmem:[%s297] sm:$0xff] %vm314, %v634
        %637 = vrot.lane.b32.xlu0 %v634, 96
        %v638 = vpop.permute.xlu0 %637
        %640 = vst.msk [vmem:[%s304] sm:$0xff] %vm314, %v638
        %s641 = sand.u32 %s146, 1
        %s642 = scalar_lea.sflag [#allocation4], %s641
        %s643 = sand.u32 %s146, 1
        %s644 = smul.addr %s643, 8
        %s645 = scalar_lea.vmem [#allocation5], %s644
        %s646 = sand.u32 %s28, 1
        %s647 = scalar_lea.sflag [#allocation7], %s646
        %s648 = sand.u32 %s172, 1
        %s649 = smul.addr %s648, 8
        %s650 = scalar_lea.vmem [#allocation6], %s649
        %s651 = sand.u32 %s28, 1
        %s652 = scalar_lea.sflag [#allocation7], %s651
        %s653 = sand.u32 %s198, 1
        %s654 = smul.addr %s653, 8
        %s655 = scalar_lea.vmem [#allocation8], %s654
        // Predicated region
        $region45: #{tpu_custom_call.1} parent=39 // pred_check
          %p656 = pneg %p156
        $region46: #{tpu_custom_call.1} parent=39 // pred_check_branch
          %658 = sbr.rel (%p656) target = $region48
        $region47: #{tpu_custom_call.1} parent=39 // pred_region
          %s660 = ssub.s32 128, 128
          %661 = vsyncadd %s642, %s660
          %s662 = smul.addr %s28, 128
          %s663 = scalar_lea.hbm %s5, %s662
          %s665 = sshll.u32 %s645, 4
          %s666 = int_to_ptr.vmem [resolvable:$true] %s665
          %668 = dma.vmem_to_hbm [thread:$0]  %s666, 128, %s663, %s642
        $region48: #{tpu_custom_call.1} parent=39 // pred_fallthru
          _
        // Predicated region
        $region49: #{tpu_custom_call.1} parent=39 // pred_check
          %p669 = pneg %p182
        $region50: #{tpu_custom_call.1} parent=39 // pred_check_branch
          %671 = sbr.rel (%p669) target = $region52
        $region51: #{tpu_custom_call.1} parent=39 // pred_region
          %s673 = ssub.s32 128, 128
          %674 = vsyncadd %s647, %s673
          %s675 = smul.addr %s28, 128
          %s676 = scalar_lea.hbm %s6, %s675
          %s678 = sshll.u32 %s650, 4
          %s679 = int_to_ptr.vmem [resolvable:$true] %s678
          %681 = dma.vmem_to_hbm [thread:$0]  %s679, 128, %s676, %s647
        $region52: #{tpu_custom_call.1} parent=39 // pred_fallthru
          _
        // Predicated region
        $region53: #{tpu_custom_call.1} parent=39 // pred_check
          %p682 = pneg %p208
        $region54: #{tpu_custom_call.1} parent=39 // pred_check_branch
          %684 = sbr.rel (%p682) target = $region56
        $region55: #{tpu_custom_call.1} parent=39 // pred_region
          %s686 = ssub.s32 128, 128
          %687 = vsyncadd %s652, %s686
          %s688 = smul.addr %s28, 128
          %s689 = scalar_lea.hbm %s7, %s688
          %s691 = sshll.u32 %s655, 4
          %s692 = int_to_ptr.vmem [resolvable:$true] %s691
          %694 = dma.vmem_to_hbm [thread:$0]  %s692, 128, %s689, %s652
        $region56: #{tpu_custom_call.1} parent=39 // pred_fallthru
          _
      $region40: #{tpu_custom_call.1} parent=5 // pred_fallthru
        _
      %p695 = scmp.le.s32.totalorder 2, %s23
      // Predicated region
      $region57: #{tpu_custom_call.1} parent=5 // pred_check
        %p696 = pneg %p695
      $region58: #{tpu_custom_call.1} parent=5 // pred_check_branch
        %698 = sbr.rel (%p696) target = $region60
      $region59: #{tpu_custom_call.1} parent=5 // pred_region
        %s699 = ssub.s32 %s23, 2
        // Predicated region
        $region61: #{tpu_custom_call.1} parent=59 // pred_check
          %p700 = pneg %p162
        $region62: #{tpu_custom_call.1} parent=59 // pred_check_branch
          %702 = sbr.rel (%p700) target = $region64
        $region63: #{tpu_custom_call.1} parent=59 // pred_region
          %s703 = sand.u32 %s147, 1
          %s704 = scalar_lea.sflag [#allocation4], %s703
          %s705 = sand.u32 %s147, 1
          %s706 = smul.addr %s705, 8
          %s707 = scalar_lea.vmem [#allocation5], %s706
          %708 = dma.done %s704, 128
        $region64: #{tpu_custom_call.1} parent=59 // pred_fallthru
          _
        // Predicated region
        $region65: #{tpu_custom_call.1} parent=59 // pred_check
          %p709 = pneg %p188
        $region66: #{tpu_custom_call.1} parent=59 // pred_check_branch
          %711 = sbr.rel (%p709) target = $region68
        $region67: #{tpu_custom_call.1} parent=59 // pred_region
          %s712 = sand.u32 %s29, 1
          %s713 = scalar_lea.sflag [#allocation7], %s712
          %s714 = sand.u32 %s173, 1
          %s715 = smul.addr %s714, 8
          %s716 = scalar_lea.vmem [#allocation6], %s715
          %717 = dma.done %s713, 128
        $region68: #{tpu_custom_call.1} parent=59 // pred_fallthru
          _
        // Predicated region
        $region69: #{tpu_custom_call.1} parent=59 // pred_check
          %p718 = pneg %p214
        $region70: #{tpu_custom_call.1} parent=59 // pred_check_branch
          %720 = sbr.rel (%p718) target = $region72
        $region71: #{tpu_custom_call.1} parent=59 // pred_region
          %s721 = sand.u32 %s29, 1
          %s722 = scalar_lea.sflag [#allocation7], %s721
          %s723 = sand.u32 %s199, 1
          %s724 = smul.addr %s723, 8
          %s725 = scalar_lea.vmem [#allocation8], %s724
          %726 = dma.done %s722, 128
        $region72: #{tpu_custom_call.1} parent=59 // pred_fallthru
          _
      $region60: #{tpu_custom_call.1} parent=5 // pred_fallthru
        _
    $region6: #{tpu_custom_call.1} parent=1 // loop_footer
      %s27 = sadd.s32 1, %s23
    $region7: #{tpu_custom_call.1} parent=1 // loop_footer_branch
      %22 = sbr.rel target = $region3
    $region8: #{tpu_custom_call.1} parent=1 // loop_exit
      _
    %727 = vsyncpa [#allocation3], 1
    %s728 = scalar_lea.sflag [#allocation3], 1
    %729 = vsyncpa %s728, 1
    %730 = vsyncpa [#allocation4], 1
    %s731 = scalar_lea.sflag [#allocation4], 1
    %732 = vsyncpa %s731, 1
    %733 = vsyncpa [#allocation7], 1
    %s734 = scalar_lea.sflag [#allocation7], 1
    %735 = vsyncpa %s734, 1

</llo_original>
